<compile_context>
chip_gen: v5e
topology: v5e:2x2
jax: 0.10.0
libtpu: 0.0.40
codegen_flags: <defaults>
</compile_context>

<pallas_src>
import math

import numpy as np
import jax
import jax.numpy as jnp
from jax.experimental import pallas as pl
from jax.experimental.pallas import tpu as pltpu

LN_EPS = 1e-5
BN_EPS = 1e-5
DIRECTION = ("x", "y")
INV_SQRT2 = 0.7071067811865475

ACT_DTYPE = jnp.bfloat16        # inter-kernel activation stream (HBM traffic halved)
_MAX_TILE_ROWS = 512            # review: 512-1024 rows hits ~85% of HBM roofline


def _compute_vmem_limit():
    # Generation-aware scoped-VMEM limit: ~3/4 of physical, capped at 96 MiB
    # (-> 96 MiB on v5e/v6e with 128 MiB physical, 48 MiB on v7x with 64 MiB physical).
    cap = 64 * 1024 * 1024
    try:
        info = pltpu.get_tpu_info()
        cap = int(getattr(info, "vmem_capacity_bytes", cap) or cap)
    except Exception:
        pass
    return int(min(max(cap * 3 // 4, 32 * 1024 * 1024), 96 * 1024 * 1024))


_VMEM_LIMIT = _compute_vmem_limit()


# ----------------------------- small helpers -----------------------------
def _round_up(n, m):
    return ((n + m - 1) // m) * m


def _choose_tile(n):
    # block == full array for small N (no ragged edge at all); 512-row tiles + masked
    # ragged last tile only at production N.
    n = max(int(n), 1)
    return n if n <= _MAX_TILE_ROWS else _MAX_TILE_ROWS


def _compiler_params():
    return pltpu.CompilerParams(dimension_semantics=("parallel",),
                                vmem_limit_bytes=_VMEM_LIMIT)


# ----------------------------- Pallas kernels -----------------------------
def _posemb_kernel(loc_ref, x_ref, w1_ref, w2_ref, b2_ref, o_ref):
    # PositionEmbeddingLearned: Linear(3->C) with eval-mode BatchNorm1d folded in (the bias
    # is folded into column 3 of the padded location), ReLU, Linear(C->C); added to features.
    h = jnp.dot(loc_ref[...], w1_ref[...], preferred_element_type=jnp.float32)
    h = jnp.maximum(h, 0.0)
    pe = jnp.dot(h.astype(jnp.bfloat16), w2_ref[...],
                 preferred_element_type=jnp.float32) + b2_ref[...]
    o_ref[...] = (x_ref[...].astype(jnp.float32) + pe).astype(o_ref.dtype)


def _glu_block_kernel(x_ref, g_ref, b_ref, w1_ref, b1_ref, w2_ref, b2_ref, o_ref):
    # TODO(synk): MambaBlock (sequence mixer) is not defined in the reference; this is a
    # per-token pre-LN gated-linear residual block used as the linear operator.
    x = x_ref[...].astype(jnp.float32)
    c = x.shape[-1]
    mu = jnp.mean(x, axis=-1, keepdims=True)
    var = jnp.mean((x - mu) ** 2, axis=-1, keepdims=True)
    h = (x - mu) * jax.lax.rsqrt(var + LN_EPS) * g_ref[...] + b_ref[...]
    hb = h.astype(jnp.bfloat16)
    # fused (C, 2C) projection -> lane-aligned split at 128
    ag = jnp.dot(hb, w1_ref[...], preferred_element_type=jnp.float32) + b1_ref[...]
    a = ag[:, :c]
    gt = ag[:, c:]
    y = (a * (gt * jax.nn.sigmoid(gt))).astype(jnp.bfloat16)      # SiLU gating
    out = x + jnp.dot(y, w2_ref[...], preferred_element_type=jnp.float32) + b2_ref[...]
    o_ref[...] = out.astype(o_ref.dtype)


def _add_ln_kernel(a_ref, b_ref, g_ref, bb_ref, o_ref):
    # PatchExpanding3D residual add + decoder LayerNorm, fused.
    x = a_ref[...].astype(jnp.float32) + b_ref[...].astype(jnp.float32)
    mu = jnp.mean(x, axis=-1, keepdims=True)
    var = jnp.mean((x - mu) ** 2, axis=-1, keepdims=True)
    y = (x - mu) * jax.lax.rsqrt(var + LN_EPS) * g_ref[...] + bb_ref[...]
    o_ref[...] = y.astype(o_ref.dtype)


def _subm_ln_gelu_kernel(blob_ref, w_ref, g_ref, b_ref, o_ref):
    # SubMConv3d(dim, dim, 3, bias=False) as ONE (TILE, 27*C) x (27*C, C) matmul,
    # fused LayerNorm + exact GELU.  Weight stays VMEM-resident (constant index_map).
    h = jnp.dot(blob_ref[...], w_ref[...], preferred_element_type=jnp.float32)
    mu = jnp.mean(h, axis=-1, keepdims=True)
    var = jnp.mean((h - mu) ** 2, axis=-1, keepdims=True)
    h = (h - mu) * jax.lax.rsqrt(var + LN_EPS) * g_ref[...] + b_ref[...]
    o_ref[...] = (0.5 * h * (1.0 + jax.lax.erf(h * INV_SQRT2))).astype(o_ref.dtype)


def _segsum_ln_kernel(x_ref, g_ref, b_ref, o_ref):
    # Dense segmented sum (slots of one merged voxel live on axis 1) + post-merge LayerNorm.
    s = jnp.sum(x_ref[...].astype(jnp.float32), axis=1)
    mu = jnp.mean(s, axis=-1, keepdims=True)
    var = jnp.mean((s - mu) ** 2, axis=-1, keepdims=True)
    y = (s - mu) * jax.lax.rsqrt(var + LN_EPS) * g_ref[...] + b_ref[...]
    o_ref[...] = y.astype(o_ref.dtype)


# ----------------------------- kernel wrappers -----------------------------
def _row_call(kernel, row_arrays, param_arrays, out_cols, out_dtype=ACT_DTYPE):
    """Row-tiled launch: pl.cdiv grid over row tiles, params VMEM-resident (constant maps)."""
    n = row_arrays[0].shape[0]
    tile = _choose_tile(n)
    in_specs = [pl.BlockSpec((tile,) + a.shape[1:],
                             lambda i, _nd=a.ndim: (i,) + (0,) * (_nd - 1))
                for a in row_arrays]
    in_specs += [pl.BlockSpec(p.shape, lambda i, _nd=p.ndim: (0,) * _nd) for p in param_arrays]
    return pl.pallas_call(
        kernel,
        grid=(pl.cdiv(n, tile),),
        in_specs=in_specs,
        out_specs=pl.BlockSpec((tile, out_cols), lambda i: (i, 0)),
        out_shape=jax.ShapeDtypeStruct((n, out_cols), out_dtype),
        compiler_params=_compiler_params(),
    )(*row_arrays, *param_arrays)


def pos_embed_add(loc, feats, p):
    return _row_call(_posemb_kernel, [loc, feats],
                     [p["w1_eff"], p["w2"], p["b2"]], feats.shape[1])


def glu_block(x, p):
    return _row_call(_glu_block_kernel, [x],
                     [p["ln_g"], p["ln_b"], p["w1"], p["b1"], p["w2"], p["b2"]], x.shape[1])


def add_layernorm(a, b, g, beta):
    return _row_call(_add_ln_kernel, [a, b], [g, beta], a.shape[1])


def subm_conv_ln_gelu(feats, nbr_idx_np, w_big, ln_g, ln_b):
    n, c = feats.shape
    k_total = w_big.shape[0]                      # 27 * C
    # invalid neighbors map to an appended all-zero row (index n)
    feats_ext = jnp.concatenate([feats, jnp.zeros((1, c), feats.dtype)], axis=0)
    # TODO(synk): at production N this XLA gather could become an in-kernel DMA gather from
    # HBM using the neighbor indices; at demo scale the blob is tiny.
    blob = jnp.take(feats_ext, jnp.asarray(nbr_idx_np), axis=0).reshape(n, k_total)
    tile = _choose_tile(n)
    return pl.pallas_call(
        _subm_ln_gelu_kernel,
        grid=(pl.cdiv(n, tile),),
        in_specs=[
            pl.BlockSpec((tile, k_total), lambda i: (i, 0)),
            pl.BlockSpec((k_total, c), lambda i: (0, 0)),
            pl.BlockSpec((1, c), lambda i: (0, 0)),
            pl.BlockSpec((1, c), lambda i: (0, 0)),
        ],
        out_specs=pl.BlockSpec((tile, c), lambda i: (i, 0)),
        out_shape=jax.ShapeDtypeStruct((n, c), ACT_DTYPE),
        compiler_params=_compiler_params(),
    )(blob, w_big, ln_g, ln_b)


def merge_scatter_ln(h, unq_inv_np, num_out, ln_g, ln_b):
    """scatter_add over unq_inv + LayerNorm, as a dense per-output-voxel slot sum.

    Host builds a [num_out, G] slot table (G = max group size, <= prod(down_scale)); empty
    slots point at an appended zero row.  The kernel is a fully vectorized sum + LN over
    (TILE, G, C) blocks -> no serial per-row stores, no resident full output in VMEM.
    """
    n, c = h.shape
    counts = np.bincount(unq_inv_np, minlength=num_out)
    G = int(_round_up(max(int(counts.max()) if counts.size else 1, 1), 8))
    order = np.argsort(unq_inv_np, kind="stable").astype(np.int64)
    starts = np.concatenate([[0], np.cumsum(counts)[:-1]])
    seg = np.full((num_out, G), n, np.int32)       # n -> appended zero row
    g_sorted = unq_inv_np[order]
    pos = np.arange(n) - starts[g_sorted]
    seg[g_sorted, pos] = order
    h_ext = jnp.concatenate([h, jnp.zeros((1, c), h.dtype)], axis=0)
    gathered = jnp.take(h_ext, jnp.asarray(seg), axis=0)          # [num_out, G, C]
    tile = _choose_tile(num_out)
    return pl.pallas_call(
        _segsum_ln_kernel,
        grid=(pl.cdiv(num_out, tile),),
        in_specs=[
            pl.BlockSpec((tile, G, c), lambda i: (i, 0, 0)),
            pl.BlockSpec((1, c), lambda i: (0, 0)),
            pl.BlockSpec((1, c), lambda i: (0, 0)),
        ],
        out_specs=pl.BlockSpec((tile, c), lambda i: (i, 0)),
        out_shape=jax.ShapeDtypeStruct((num_out, c), ACT_DTYPE),
        compiler_params=_compiler_params(),
    )(gathered, ln_g, ln_b)


# ----------------------------- host-side (numpy) index plans -----------------------------
def pos_embed_location_np(coords, spatial_shape):
    window_shape = list(spatial_shape[::-1])  # [W, H, D]
    if window_shape[-1] == 1:
        win_x, win_y = window_shape[:2]
        win_z = 0
        ndim = 2
    else:
        win_x, win_y, win_z = window_shape
        ndim = 3
    coors = coords[:, 1:].astype(np.float32)   # (z, y, x)
    y = (coors[:, 1] - win_y / 2.0) / win_y * 2 * 3.1415   # 3.1415 matches the reference
    x = (coors[:, 2] - win_x / 2.0) / win_x * 2 * 3.1415
    n = coords.shape[0]
    loc = np.zeros((n, 8), np.float32)         # padded to K=8 for an aligned MXU contraction
    loc[:, 0] = x
    loc[:, 1] = y
    if ndim == 3:
        loc[:, 2] = (coors[:, 0] - win_z / 2.0) / win_z * 2 * 3.1415
    # TODO(synk): the reference 2D path uses Linear(2, C); here z stays 0 for that case.
    loc[:, 3] = 1.0                            # bias column (folded BN bias lives in w1_eff row 3)
    return loc


def subm_neighbor_plan_np(coords, spatial_shape, batch_size):
    D, H, W = spatial_shape
    n = coords.shape[0]
    grid = -np.ones((batch_size, D, H, W), np.int64)
    grid[coords[:, 0], coords[:, 1], coords[:, 2], coords[:, 3]] = np.arange(n)
    idx = np.full((n, 27), n, np.int32)        # n == appended all-zero row (invalid neighbor)
    k = 0
    for dz in (-1, 0, 1):
        for dy in (-1, 0, 1):
            for dx in (-1, 0, 1):
                zz, yy, xx = coords[:, 1] + dz, coords[:, 2] + dy, coords[:, 3] + dx
                valid = (zz >= 0) & (zz < D) & (yy >= 0) & (yy < H) & (xx >= 0) & (xx < W)
                nb = np.where(valid,
                              grid[coords[:, 0], zz.clip(0, D - 1), yy.clip(0, H - 1),
                                   xx.clip(0, W - 1)],
                              -1)
                idx[:, k] = np.where(nb >= 0, nb, n).astype(np.int32)
                k += 1
    return idx


def merge_plan_np(coords, spatial_shape, down_scale):
    D, H, W = spatial_shape
    c = coords.astype(np.int64).copy()
    c[:, 3] //= down_scale[0]
    c[:, 2] //= down_scale[1]
    c[:, 1] //= down_scale[2]
    scale_xyz = (D // down_scale[2]) * (H // down_scale[1]) * (W // down_scale[0])
    scale_yz = (D // down_scale[2]) * (H // down_scale[1])
    scale_z = D // down_scale[2]
    merge_coords = c[:, 0] * scale_xyz + c[:, 3] * scale_yz + c[:, 2] * scale_z + c[:, 1]
    new_ss = [int(math.ceil(spatial_shape[i] / down_scale[2 - i])) for i in range(3)]
    unq, unq_inv = np.unique(merge_coords, return_inverse=True)
    unq_inv = unq_inv.reshape(-1)
    voxel_coords = np.stack([unq // scale_xyz, unq % scale_xyz // scale_yz,
                             unq % scale_yz // scale_z, unq % scale_z], 1)
    voxel_coords = voxel_coords[:, [0, 3, 2, 1]].astype(np.int64)
    return unq_inv.astype(np.int32), voxel_coords, new_ss


# ----------------------------- module pieces (JAX glue around kernels) -----------------------------
def lion_layer(feats, blocks_params):
    # TODO(synk): the reference LIONLayer reorders tokens into flattened windows
    # (FlattenedWindowMapping) and runs a MambaBlock per direction.  MambaBlock's definition is
    # not provided, so a per-token gated-linear residual block stands in; for a per-token
    # operator the window gather/scatter round trip is an exact identity permutation and is
    # therefore skipped entirely (saves 4 full [N, C] HBM round trips per layer).
    for p in blocks_params:
        feats = glu_block(feats, p)
    return feats


def patch_merging(feats, coords, spatial_shape, batch_size, p, down_scale):
    nbr_idx = subm_neighbor_plan_np(coords, spatial_shape, batch_size)
    h = subm_conv_ln_gelu(feats, nbr_idx, p["w_sub"], p["ln1_g"], p["ln1_b"])
    unq_inv, voxel_coords, new_ss = merge_plan_np(coords, spatial_shape, down_scale)
    xm = merge_scatter_ln(h, unq_inv, voxel_coords.shape[0], p["norm_g"], p["norm_b"])
    return xm, unq_inv, voxel_coords, new_ss


def lion_block_forward(feats, coords0, spatial_shape0, batch_size, params, cfg):
    depth = cfg["depth"]
    down_scales = cfg["down_scales"]

    x_feats = feats.astype(ACT_DTYPE)
    coords, ss = coords0, list(spatial_shape0)
    feats_list, coords_list, ss_list, unq_inv_list = [], [], [], []

    # ---------------- encoder ----------------
    for idx in range(depth):
        loc = pos_embed_location_np(coords, ss)
        x_feats = pos_embed_add(jnp.asarray(loc), x_feats, params["pos_emb"][idx])
        x_feats = lion_layer(x_feats, params["encoder"][idx])
        feats_list.append(x_feats)
        coords_list.append(coords)
        ss_list.append(list(ss))
        x_feats, unq_inv, coords, ss = patch_merging(
            x_feats, coords, ss, batch_size, params["downsample"][idx], down_scales[idx])
        unq_inv_list.append(unq_inv)

    # ---------------- decoder ----------------
    for i in range(depth):
        enc_idx = depth - 1 - i
        x_feats = lion_layer(x_feats, params["decoder"][i])
        # PatchExpanding3D + decoder LayerNorm fused: gather coarse -> fine, add skip, LN.
        up = jnp.take(x_feats, jnp.asarray(unq_inv_list[enc_idx]), axis=0)
        x_feats = add_layernorm(feats_list[enc_idx], up,
                                params["decoder_norm"][i]["g"], params["decoder_norm"][i]["b"])
        coords, ss = coords_list[enc_idx], ss_list[enc_idx]
    return x_feats, coords, ss


# ----------------------------- deterministic parameter init -----------------------------
def init_params(key, dim, depth, n_dir):
    keys = iter(jax.random.split(key, 512))

    def w(shape, scale=0.05, dtype=jnp.float32):
        return (scale * jax.random.normal(next(keys), shape, jnp.float32)).astype(dtype)

    def block_params():
        return dict(ln_g=jnp.ones((1, dim), jnp.float32), ln_b=jnp.zeros((1, dim), jnp.float32),
                    w1=w((dim, 2 * dim), dtype=jnp.bfloat16), b1=w((1, 2 * dim), 0.01),
                    w2=w((dim, dim), dtype=jnp.bfloat16), b2=w((1, dim), 0.01))

    def posemb_params():
        w1 = w((3, dim))
        b1 = w((1, dim), 0.01)
        # eval-mode BatchNorm1d (PyTorch defaults: mean=0, var=1, gamma=1, beta=0) folded
        # exactly into the first Linear; the folded bias goes into row 3 of the K=8 weight.
        bn_gamma = jnp.ones((dim,), jnp.float32)
        bn_beta = jnp.zeros((dim,), jnp.float32)
        bn_mean = jnp.zeros((dim,), jnp.float32)
        bn_var = jnp.ones((dim,), jnp.float32)
        s = bn_gamma * jax.lax.rsqrt(bn_var + BN_EPS)
        t = bn_beta - bn_mean * s
        w1_eff = jnp.zeros((8, dim), jnp.float32)
        w1_eff = w1_eff.at[:3].set(w1 * s[None, :])
        w1_eff = w1_eff.at[3].set((b1 * s[None, :] + t[None, :])[0])
        return dict(w1_eff=w1_eff,
                    w2=w((dim, dim), dtype=jnp.bfloat16), b2=w((1, dim), 0.01))

    return dict(
        pos_emb=[posemb_params() for _ in range(depth)],
        encoder=[[block_params() for _ in range(n_dir)] for _ in range(depth)],
        downsample=[dict(w_sub=w((27 * dim, dim), 0.02, jnp.bfloat16),   # taps stacked along K
                         ln1_g=jnp.ones((1, dim), jnp.float32),
                         ln1_b=jnp.zeros((1, dim), jnp.float32),
                         norm_g=jnp.ones((1, dim), jnp.float32),
                         norm_b=jnp.zeros((1, dim), jnp.float32))
                    for _ in range(depth)],
        decoder=[[block_params() for _ in range(n_dir)] for _ in range(depth)],
        decoder_norm=[dict(g=jnp.ones((1, dim), jnp.float32), b=jnp.zeros((1, dim), jnp.float32))
                      for _ in range(depth)],
    )


# ----------------------------- main -----------------------------
if __name__ == "__main__":
    key = jax.random.PRNGKey(0)
    batch_size = 2
    dim = 128                           # lane-dense channel count (multiple of 128)
    depth = 2
    spatial_shape = [4, 16, 16]         # [D, H, W]  (z, y, x)
    down_scales = [[2, 2, 2], [2, 2, 2]]
    n_per_batch = 40

    k_coord, k_feat, k_param = jax.random.split(key, 3)
    D, H, W = spatial_shape
    coords_list = []
    for b in range(batch_size):
        kb = jax.random.fold_in(k_coord, b)
        lin = np.asarray(jax.random.permutation(kb, D * H * W))[:n_per_batch].astype(np.int64)
        z = lin // (H * W)
        y = (lin // W) % H
        x = lin % W
        coords_list.append(np.stack([np.full(n_per_batch, b, np.int64), z, y, x], 1))
    coords = np.concatenate(coords_list, 0)
    n_total = coords.shape[0]
    feats = jax.random.normal(k_feat, (n_total, dim), jnp.float32)

    params = init_params(k_param, dim, depth, len(DIRECTION))
    cfg = dict(depth=depth, down_scales=down_scales)

    out_feats, out_coords, out_ss = lion_block_forward(feats, coords, spatial_shape,
                                                       batch_size, params, cfg)
    jax.block_until_ready(out_feats)
    assert out_feats.shape == (n_total, dim)
    assert bool(jnp.all(jnp.isfinite(out_feats.astype(jnp.float32))))
    print("KERNEL_OK")
</pallas_src>

<mosaic_0001>
module attributes {stable_mosaic.version = 11 : i64} {
  func.func @_posemb_kernel(%arg0: i32, %arg1: memref<80x8xf32, #tpu.memory_space<vmem>>, %arg2: memref<80x128xbf16, #tpu.memory_space<vmem>>, %arg3: memref<8x128xf32, #tpu.memory_space<vmem>>, %arg4: memref<128x128xbf16, #tpu.memory_space<vmem>>, %arg5: memref<1x128xf32, #tpu.memory_space<vmem>>, %arg6: memref<80x128xbf16, #tpu.memory_space<vmem>>) attributes {dimension_semantics = [#tpu.dimension_semantics<parallel>], iteration_bounds = array<i64: 1>, scalar_prefetch = 0 : i64, scratch_operands = 0 : i64, tpu.core_type = #tpu.core_type<tc>, window_params = [{transform_indices = @transform_0, window_bounds = array<i64: 80, 8>}, {transform_indices = @transform_1, window_bounds = array<i64: 80, 128>}, {pipeline_mode = #tpu.pipeline_mode<synchronous>, transform_indices = @transform_2, window_bounds = array<i64: 8, 128>}, {pipeline_mode = #tpu.pipeline_mode<synchronous>, transform_indices = @transform_3, window_bounds = array<i64: 128, 128>}, {pipeline_mode = #tpu.pipeline_mode<synchronous>, transform_indices = @transform_4, window_bounds = array<i64: 1, 128>}, {transform_indices = @transform_5, window_bounds = array<i64: 80, 128>}]} {
    %c0 = arith.constant 0 : index
    %c0_0 = arith.constant 0 : index
    %0 = vector.load %arg1[%c0, %c0_0] : memref<80x8xf32, #tpu.memory_space<vmem>>, vector<80x8xf32>
    %c0_1 = arith.constant 0 : index
    %c0_2 = arith.constant 0 : index
    %1 = vector.load %arg3[%c0_1, %c0_2] : memref<8x128xf32, #tpu.memory_space<vmem>>, vector<8x128xf32>
    %cst = arith.constant dense<0.000000e+00> : vector<80x128xf32>
    %2 = tpu.matmul %0, %1, %cst {dimension_numbers = #tpu.dot_dimension_numbers<[1], [0], [0], [1], [0, 0, 1, 1], [], []>} : vector<80x8xf32>, vector<8x128xf32>, vector<80x128xf32> -> vector<80x128xf32>
    %cst_3 = arith.constant 0.000000e+00 : f32
    %3 = vector.broadcast %cst_3 : f32 to vector<80x128xf32>
    %4 = arith.maximumf %2, %3 : vector<80x128xf32>
    %5 = arith.truncf %4 : vector<80x128xf32> to vector<80x128xbf16>
    %c0_4 = arith.constant 0 : index
    %c0_5 = arith.constant 0 : index
    %6 = vector.load %arg4[%c0_4, %c0_5] : memref<128x128xbf16, #tpu.memory_space<vmem>>, vector<128x128xbf16>
    %cst_6 = arith.constant dense<0.000000e+00> : vector<80x128xf32>
    %7 = tpu.matmul %5, %6, %cst_6 {dimension_numbers = #tpu.dot_dimension_numbers<[1], [0], [0], [1], [0, 0, 1, 1], [], []>} : vector<80x128xbf16>, vector<128x128xbf16>, vector<80x128xf32> -> vector<80x128xf32>
    %c0_7 = arith.constant 0 : index
    %c0_8 = arith.constant 0 : index
    %8 = vector.load %arg5[%c0_7, %c0_8] : memref<1x128xf32, #tpu.memory_space<vmem>>, vector<1x128xf32>
    %9 = vector.broadcast %8 : vector<1x128xf32> to vector<80x128xf32>
    %10 = arith.addf %7, %9 : vector<80x128xf32>
    %c0_9 = arith.constant 0 : index
    %c0_10 = arith.constant 0 : index
    %11 = vector.load %arg2[%c0_9, %c0_10] : memref<80x128xbf16, #tpu.memory_space<vmem>>, vector<80x128xbf16>
    %12 = arith.extf %11 : vector<80x128xbf16> to vector<80x128xf32>
    %13 = arith.addf %12, %10 : vector<80x128xf32>
    %14 = arith.truncf %13 : vector<80x128xf32> to vector<80x128xbf16>
    %c0_11 = arith.constant 0 : index
    %c0_12 = arith.constant 0 : index
    %15 = vector.load %arg6[%c0_11, %c0_12] : memref<80x128xbf16, #tpu.memory_space<vmem>>, vector<80x128xbf16>
    tpu.vector_store %arg6[%c0_11, %c0_12], %14 {strides = array<i32>} : memref<80x128xbf16, #tpu.memory_space<vmem>>, vector<80x128xbf16>,
    return
  }
  func.func @transform_0(%arg0: i32) -> (i32, i32) {
    %c0_i32 = arith.constant 0 : i32
    %c0_i32_0 = arith.constant 0 : i32
    return %arg0, %c0_i32 : i32, i32
  }
  func.func @transform_1(%arg0: i32) -> (i32, i32) {
    %c0_i32 = arith.constant 0 : i32
    %c0_i32_0 = arith.constant 0 : i32
    return %arg0, %c0_i32 : i32, i32
  }
  func.func @transform_2(%arg0: i32) -> (i32, i32) {
    %c0_i32 = arith.constant 0 : i32
    %c0_i32_0 = arith.constant 0 : i32
    %c0_i32_1 = arith.constant 0 : i32
    return %c0_i32, %c0_i32_0 : i32, i32
  }
  func.func @transform_3(%arg0: i32) -> (i32, i32) {
    %c0_i32 = arith.constant 0 : i32
    %c0_i32_0 = arith.constant 0 : i32
    %c0_i32_1 = arith.constant 0 : i32
    return %c0_i32, %c0_i32_0 : i32, i32
  }
  func.func @transform_4(%arg0: i32) -> (i32, i32) {
    %c0_i32 = arith.constant 0 : i32
    %c0_i32_0 = arith.constant 0 : i32
    %c0_i32_1 = arith.constant 0 : i32
    return %c0_i32, %c0_i32_0 : i32, i32
  }
  func.func @transform_5(%arg0: i32) -> (i32, i32) {
    %c0_i32 = arith.constant 0 : i32
    %c0_i32_0 = arith.constant 0 : i32
    return %arg0, %c0_i32 : i32, i32
  }
}

</mosaic_0001>

<llo_original>
// kernel: tpu_custom_call.1
$region0: #{tpu_custom_call.1}
  #allocation0 [shape = 'u32[]', space=smem, size = 0x4, offset = 0x4, fixed_abs, tag = 'smem constant byte address 0x4 - core index']
  #allocation1 [shape = 'u32[72,128]{1,0:T(1,128)}', space=vmem, size = 0x9000, scoped, tag = 'internal scratch']
  %s0 = inlined_call_operand.vmem [shape: f32[80,8], index: 0, kind: input, shape index: {}]
  %s1 = inlined_call_operand.hbm [shape: bf16[80,128], index: 1, kind: input, shape index: {}]
  %s2 = inlined_call_operand.vmem [shape: f32[8,128], index: 2, kind: input, shape index: {}]
  %s3 = inlined_call_operand.vmem [shape: bf16[128,128], index: 3, kind: input, shape index: {}]
  %s4 = inlined_call_operand.vmem [shape: f32[1,128], index: 4, kind: input, shape index: {}]
  %s5 = inlined_call_operand.hbm [shape: bf16[80,128], index: 5, kind: output, shape index: {}]
  %s6 = sld [smem:[#allocation0]]
  $region34: #{tpu_custom_call.1} parent=0
    _
  %s8 = ssub.s32 1, %s6
  %s9 = scalar_select 0, %s8, %s6
  $region1: #{tpu_custom_call.1} parent=0
    #allocation2 [shape = 'u8[20480]{0}', space=vmem, size = 0x5000, scoped, tag = 'input window, operand 1, single buffered']
    #allocation3 [shape = 's32[1]{0}', space=sflag, size = 0x4, scoped, tag = 'scoped memory for tpu_custom_call.1']
    #allocation4 [shape = 's32[1]{0}', space=sflag, size = 0x4, scoped, tag = 'scoped memory for tpu_custom_call.1']
    #allocation5 [shape = 'u8[20480]{0}', space=vmem, size = 0x5000, scoped, tag = 'output window, operand 0, single buffered']
    %10 = vsyncpa [#allocation3], 0
    %11 = vsyncpa [#allocation4], 0
    // Predicated region
    $region2: #{tpu_custom_call.1} parent=1 // pred_check
      _
    $region3: #{tpu_custom_call.1} parent=1 // pred_check_branch
      %13 = sbr.rel (0) target = $region5
    $region4: #{tpu_custom_call.1} parent=1 // pred_region
      _
    $region5: #{tpu_custom_call.1} parent=1 // pred_fallthru
      _
    // Predicated region
    $region6: #{tpu_custom_call.1} parent=1 // pred_check
      _
    $region7: #{tpu_custom_call.1} parent=1 // pred_check_branch
      %15 = sbr.rel (0) target = $region9
    $region8: #{tpu_custom_call.1} parent=1 // pred_region
      %17 = vsyncadd [#allocation3], 0
      %s18 = sshll.u32 %s1, 4
      %s19 = int_to_ptr.hbm [resolvable:$true] %s18
      %s20 = sshll.u32 [#allocation2], 4
      %s21 = int_to_ptr.vmem [resolvable:$true] %s20
      %26 = dma.hbm_to_vmem [thread:$0]  %s19, 640, %s21, [#allocation3], 64, 64, 4
    $region9: #{tpu_custom_call.1} parent=1 // pred_fallthru
      _
    // Predicated region
    $region10: #{tpu_custom_call.1} parent=1 // pred_check
      _
    $region11: #{tpu_custom_call.1} parent=1 // pred_check_branch
      %28 = sbr.rel (0) target = $region13
    $region12: #{tpu_custom_call.1} parent=1 // pred_region
      _
    $region13: #{tpu_custom_call.1} parent=1 // pred_fallthru
      _
    // Predicated region
    $region14: #{tpu_custom_call.1} parent=1 // pred_check
      _
    $region15: #{tpu_custom_call.1} parent=1 // pred_check_branch
      %30 = sbr.rel (0) target = $region17
    $region16: #{tpu_custom_call.1} parent=1 // pred_region
      _
    $region17: #{tpu_custom_call.1} parent=1 // pred_fallthru
      _
    // Predicated region
    $region18: #{tpu_custom_call.1} parent=1 // pred_check
      _
    $region19: #{tpu_custom_call.1} parent=1 // pred_check_branch
      %32 = sbr.rel (0) target = $region21
    $region20: #{tpu_custom_call.1} parent=1 // pred_region
      _
    $region21: #{tpu_custom_call.1} parent=1 // pred_fallthru
      _
    // Predicated region
    $region22: #{tpu_custom_call.1} parent=1 // pred_check
      _
    $region23: #{tpu_custom_call.1} parent=1 // pred_check_branch
      %34 = sbr.rel (0) target = $region25
    $region24: #{tpu_custom_call.1} parent=1 // pred_region
      %36 = dma.done [#allocation3], 640
    $region25: #{tpu_custom_call.1} parent=1 // pred_fallthru
      _
    %v37 = vld [vmem:[%s0] sm:$0xff]
    %v38 = vld [vmem:[%s0 + $0x8] sm:$0xff]
    %v39 = vld [vmem:[%s0 + $0x10] sm:$0xff]
    %v40 = vld [vmem:[%s0 + $0x18] sm:$0xff]
    %v41 = vld [vmem:[%s0 + $0x20] sm:$0xff]
    %v42 = vld [vmem:[%s0 + $0x28] sm:$0xff]
    %v43 = vld [vmem:[%s0 + $0x30] sm:$0xff]
    %v44 = vld [vmem:[%s0 + $0x38] sm:$0xff]
    %v45 = vld [vmem:[%s0 + $0x40] sm:$0xff]
    %v46 = vld [vmem:[%s0 + $0x48] sm:$0xff]
    %v47 = vld [vmem:[%s2] sm:$0xff]
    %vm48 = vcmask 64512
    %v50 = vsel %vm48, %v37, 0
    %v53 = vsel %vm48, %v38, 0
    %v56 = vsel %vm48, %v39, 0
    %v59 = vsel %vm48, %v40, 0
    %v62 = vsel %vm48, %v41, 0
    %v65 = vsel %vm48, %v42, 0
    %v68 = vsel %vm48, %v43, 0
    %v71 = vsel %vm48, %v44, 0
    %v74 = vsel %vm48, %v45, 0
    %v77 = vsel %vm48, %v46, 0
    %79 = vmatpush.msra.mxu0 0.0
    %80 = vmatpush.msra.mxu0 0.0
    %81 = vmatpush.msra.mxu0 0.0
    %82 = vmatpush.msra.mxu0 0.0
    %83 = vmatpush.msra.mxu0 0.0
    %84 = vmatpush.msra.mxu0 0.0
    %85 = vmatpush.msra.mxu0 0.0
    %86 = vmatpush.msra.mxu0 0.0
    %87 = vmatpush.msra.mxu0 0.0
    %88 = vmatpush.msra.mxu0 0.0
    %89 = vmatpush.msra.mxu0 0.0
    %90 = vmatpush.msra.mxu0 0.0
    %91 = vmatpush.msra.mxu0 0.0
    %92 = vmatpush.msra.mxu0 0.0
    %93 = vmatpush.msra.mxu0 0.0
    %94 = vmatpush.msra.mxu0 %v47
    %95 = vmatmul.f32.gmra.mxu0 %v50
    %v96 = vpop.f32.mrf.mxu0
    %v97 = vadd.f32 0.0, %v96
    %98 = vmatmul.f32.gmra.mxu0 %v53
    %v99 = vpop.f32.mrf.mxu0
    %v100 = vadd.f32 0.0, %v99
    %101 = vmatmul.f32.gmra.mxu0 %v56
    %v102 = vpop.f32.mrf.mxu0
    %v103 = vadd.f32 0.0, %v102
    %104 = vmatmul.f32.gmra.mxu0 %v59
    %v105 = vpop.f32.mrf.mxu0
    %v106 = vadd.f32 0.0, %v105
    %107 = vmatmul.f32.gmra.mxu0 %v62
    %v108 = vpop.f32.mrf.mxu0
    %v109 = vadd.f32 0.0, %v108
    %110 = vmatmul.f32.gmra.mxu0 %v65
    %v111 = vpop.f32.mrf.mxu0
    %v112 = vadd.f32 0.0, %v111
    %113 = vmatmul.f32.gmra.mxu0 %v68
    %v114 = vpop.f32.mrf.mxu0
    %v115 = vadd.f32 0.0, %v114
    %116 = vmatmul.f32.gmra.mxu0 %v71
    %v117 = vpop.f32.mrf.mxu0
    %v118 = vadd.f32 0.0, %v117
    %119 = vmatmul.f32.gmra.mxu0 %v74
    %v120 = vpop.f32.mrf.mxu0
    %v121 = vadd.f32 0.0, %v120
    %122 = vmatmul.f32.gmra.mxu0 %v77
    %v123 = vpop.f32.mrf.mxu0
    %v124 = vadd.f32 0.0, %v123
    %125 = vdwg.mxu0
    %v126 = vmax.f32 %v97, 0.0
    %v127 = vmax.f32 %v100, 0.0
    %v128 = vmax.f32 %v103, 0.0
    %v129 = vmax.f32 %v106, 0.0
    %v130 = vmax.f32 %v109, 0.0
    %v131 = vmax.f32 %v112, 0.0
    %v132 = vmax.f32 %v115, 0.0
    %v133 = vmax.f32 %v118, 0.0
    %v134 = vmax.f32 %v121, 0.0
    %v135 = vmax.f32 %v124, 0.0
    %v136 = vpack.c.bf16 %v127, %v126
    %v137 = vpack.c.bf16 %v129, %v128
    %v138 = vpack.c.bf16 %v131, %v130
    %v139 = vpack.c.bf16 %v133, %v132
    %v140 = vpack.c.bf16 %v135, %v134
    %v141 = vld [vmem:[%s3] sm:$0xf]
    %v142 = vld [vmem:[%s3 + $0x4] sm:$0xf]
    %v143 = vld [vmem:[%s3 + $0x8] sm:$0xf]
    %v144 = vld [vmem:[%s3 + $0xc] sm:$0xf]
    %v145 = vld [vmem:[%s3 + $0x10] sm:$0xf]
    %v146 = vld [vmem:[%s3 + $0x14] sm:$0xf]
    %v147 = vld [vmem:[%s3 + $0x18] sm:$0xf]
    %v148 = vld [vmem:[%s3 + $0x1c] sm:$0xf]
    %v149 = vld [vmem:[%s3 + $0x20] sm:$0xf]
    %v150 = vld [vmem:[%s3 + $0x24] sm:$0xf]
    %v151 = vld [vmem:[%s3 + $0x28] sm:$0xf]
    %v152 = vld [vmem:[%s3 + $0x2c] sm:$0xf]
    %v153 = vld [vmem:[%s3 + $0x30] sm:$0xf]
    %v154 = vld [vmem:[%s3 + $0x34] sm:$0xf]
    %v155 = vld [vmem:[%s3 + $0x38] sm:$0xf]
    %v156 = vld [vmem:[%s3 + $0x3c] sm:$0xf]
    %v157 = vld [vmem:[%s4] sm:$0x1]
    %v159 = vperm.slane %v157, 0
    %v177 = vunpack.c.l.b16 %v141
    %v178 = vunpack.c.l.b16 %v142
    %v179 = vunpack.c.l.b16 %v143
    %v180 = vunpack.c.l.b16 %v144
    %v181 = vunpack.c.l.b16 %v145
    %v182 = vunpack.c.l.b16 %v146
    %v183 = vunpack.c.l.b16 %v147
    %v184 = vunpack.c.l.b16 %v148
    %v185 = vunpack.c.l.b16 %v149
    %v186 = vunpack.c.l.b16 %v150
    %v187 = vunpack.c.l.b16 %v151
    %v188 = vunpack.c.l.b16 %v152
    %v189 = vunpack.c.l.b16 %v153
    %v190 = vunpack.c.l.b16 %v154
    %v191 = vunpack.c.l.b16 %v155
    %v192 = vunpack.c.l.b16 %v156
    %v193 = vpack.c.b16 %v178, %v177
    %v194 = vpack.c.b16 %v180, %v179
    %v195 = vpack.c.b16 %v182, %v181
    %v196 = vpack.c.b16 %v184, %v183
    %v197 = vpack.c.b16 %v186, %v185
    %v198 = vpack.c.b16 %v188, %v187
    %v199 = vpack.c.b16 %v190, %v189
    %v200 = vpack.c.b16 %v192, %v191
    %209 = vmatpush.bf16.msra.mxu0 %v200
    %210 = vmatpush.bf16.msra.mxu0 %v199
    %211 = vmatpush.bf16.msra.mxu0 %v198
    %212 = vmatpush.bf16.msra.mxu0 %v197
    %213 = vmatpush.bf16.msra.mxu0 %v196
    %214 = vmatpush.bf16.msra.mxu0 %v195
    %215 = vmatpush.bf16.msra.mxu0 %v194
    %216 = vmatpush.bf16.msra.mxu0 %v193
    %217 = vmatmul.bf16.gmra.mxu0 %v136
    %v218 = vpop.f32.mrf.mxu0
    %v219 = vadd.f32 %v159, %v218
    %v220 = vpop.f32.mrf.mxu0
    %v221 = vadd.f32 %v159, %v220
    %222 = vmatmul.bf16.gmra.mxu0 %v137
    %v223 = vpop.f32.mrf.mxu0
    %v224 = vadd.f32 %v159, %v223
    %v225 = vpop.f32.mrf.mxu0
    %v226 = vadd.f32 %v159, %v225
    %227 = vmatmul.bf16.gmra.mxu0 %v138
    %v228 = vpop.f32.mrf.mxu0
    %v229 = vadd.f32 %v159, %v228
    %v230 = vpop.f32.mrf.mxu0
    %v231 = vadd.f32 %v159, %v230
    %232 = vmatmul.bf16.gmra.mxu0 %v139
    %v233 = vpop.f32.mrf.mxu0
    %v234 = vadd.f32 %v159, %v233
    %v235 = vpop.f32.mrf.mxu0
    %v236 = vadd.f32 %v159, %v235
    %237 = vmatmul.bf16.gmra.mxu0 %v140
    %v238 = vpop.f32.mrf.mxu0
    %v239 = vadd.f32 %v159, %v238
    %v240 = vpop.f32.mrf.mxu0
    %v241 = vadd.f32 %v159, %v240
    %242 = vdwg.mxu0
    %v243 = vld [vmem:[#allocation2] sm:$0xf]
    %v244 = vld [vmem:[#allocation2 + $0x4] sm:$0xf]
    %v245 = vld [vmem:[#allocation2 + $0x8] sm:$0xf]
    %v246 = vld [vmem:[#allocation2 + $0xc] sm:$0xf]
    %v247 = vld [vmem:[#allocation2 + $0x10] sm:$0xf]
    %v248 = vld [vmem:[#allocation2 + $0x14] sm:$0xf]
    %v249 = vld [vmem:[#allocation2 + $0x18] sm:$0xf]
    %v250 = vld [vmem:[#allocation2 + $0x1c] sm:$0xf]
    %v251 = vld [vmem:[#allocation2 + $0x20] sm:$0xf]
    %v252 = vld [vmem:[#allocation2 + $0x24] sm:$0xf]
    %v253 = vunpack.c.l.bf16 %v243
    %v254 = vunpack.c.l.bf16 %v244
    %v255 = vunpack.c.l.bf16 %v245
    %v256 = vunpack.c.l.bf16 %v246
    %v257 = vunpack.c.l.bf16 %v247
    %v258 = vunpack.c.l.bf16 %v248
    %v259 = vunpack.c.l.bf16 %v249
    %v260 = vunpack.c.l.bf16 %v250
    %v261 = vunpack.c.l.bf16 %v251
    %v262 = vunpack.c.l.bf16 %v252
    %v263 = vadd.f32 %v253, %v219
    %v264 = vadd.f32 %v254, %v221
    %v265 = vadd.f32 %v255, %v224
    %v266 = vadd.f32 %v256, %v226
    %v267 = vadd.f32 %v257, %v229
    %v268 = vadd.f32 %v258, %v231
    %v269 = vadd.f32 %v259, %v234
    %v270 = vadd.f32 %v260, %v236
    %v271 = vadd.f32 %v261, %v239
    %v272 = vadd.f32 %v262, %v241
    %v273 = vpack.c.bf16 %v263, %v263
    %v274 = vpack.c.bf16 %v264, %v264
    %v275 = vpack.c.bf16 %v265, %v265
    %v276 = vpack.c.bf16 %v266, %v266
    %v277 = vpack.c.bf16 %v267, %v267
    %v278 = vpack.c.bf16 %v268, %v268
    %v279 = vpack.c.bf16 %v269, %v269
    %v280 = vpack.c.bf16 %v270, %v270
    %v281 = vpack.c.bf16 %v271, %v271
    %v282 = vpack.c.bf16 %v272, %v272
    %283 = vst [vmem:[#allocation5] sm:$0xf] %v273
    %284 = vst [vmem:[#allocation5 + $0x4] sm:$0xf] %v274
    %285 = vst [vmem:[#allocation5 + $0x8] sm:$0xf] %v275
    %286 = vst [vmem:[#allocation5 + $0xc] sm:$0xf] %v276
    %287 = vst [vmem:[#allocation5 + $0x10] sm:$0xf] %v277
    %288 = vst [vmem:[#allocation5 + $0x14] sm:$0xf] %v278
    %289 = vst [vmem:[#allocation5 + $0x18] sm:$0xf] %v279
    %290 = vst [vmem:[#allocation5 + $0x1c] sm:$0xf] %v280
    %291 = vst [vmem:[#allocation5 + $0x20] sm:$0xf] %v281
    %292 = vst [vmem:[#allocation5 + $0x24] sm:$0xf] %v282
    // Predicated region
    $region26: #{tpu_custom_call.1} parent=1 // pred_check
      _
    $region27: #{tpu_custom_call.1} parent=1 // pred_check_branch
      %294 = sbr.rel (0) target = $region29
    $region28: #{tpu_custom_call.1} parent=1 // pred_region
      %296 = vsyncadd [#allocation4], 0
      %s297 = sshll.u32 [#allocation5], 4
      %s298 = int_to_ptr.vmem [resolvable:$true] %s297
      %s299 = sshll.u32 %s5, 4
      %s300 = int_to_ptr.hbm [resolvable:$true] %s299
      %305 = dma.vmem_to_hbm [thread:$0]  %s298, 640, %s300, [#allocation4], 64, 64, 4
    $region29: #{tpu_custom_call.1} parent=1 // pred_fallthru
      _
    // Predicated region
    $region30: #{tpu_custom_call.1} parent=1 // pred_check
      _
    $region31: #{tpu_custom_call.1} parent=1 // pred_check_branch
      %307 = sbr.rel (0) target = $region33
    $region32: #{tpu_custom_call.1} parent=1 // pred_region
      %309 = dma.done [#allocation4], 640
    $region33: #{tpu_custom_call.1} parent=1 // pred_fallthru
      _
    %310 = vsyncpa [#allocation3], 1
    %311 = vsyncpa [#allocation4], 1

</llo_original>
